<compile_context>
chip_gen: v7x
topology: tpu7x:2x2x1
jax: 0.10.0
libtpu: 0.0.40
codegen_flags: <defaults>
</compile_context>

<pallas_src>
import functools

import jax
import jax.numpy as jnp
from jax.experimental import pallas as pl
from jax.experimental.pallas import tpu as pltpu

LANES = 128
# Row granularity: 32 satisfies the minimum (sublane, lane) tiling for every input dtype
# we may ship (f32: 8, bf16: 16, int8: 32) and keeps blocks vreg-aligned.
ROW_ALIGN = 32


def _wmse_kernel(w_ref, p_ref, t_ref, o_ref, acc_ref, *, num_classes):
    """Grid = (parallel_chunks, reduction_steps).

    Each step streams a (TR, 128) tile of preds/targets, builds per-element class
    weights, and folds the weighted squared error into an (8, 128) f32 VMEM
    accumulator using vreg-aligned adds only.  The final step of each parallel
    chunk stores the (8, 128) partial; the wrapper does the tiny final reduce.
    """
    s = pl.program_id(1)

    @pl.when(s == 0)
    def _():
        acc_ref[...] = jnp.zeros_like(acc_ref)

    p = p_ref[...].astype(jnp.float32)   # (TR, 128), upcast after DMA
    t = t_ref[...].astype(jnp.float32)   # integer classes (or f32) -> f32

    # Class -> weight lookup.  Static unroll is fine for small num_classes.
    # TODO(synk): for >~16 classes, switch to a one-hot x weight matmul on the idle MXU.
    wl = jnp.zeros_like(t)
    for i in range(num_classes):
        wl = jnp.where(t == jnp.float32(i), w_ref[i], wl)

    diff = p - t
    contrib = wl * diff * diff           # (TR, 128)

    # Fold (TR, 128) -> (8, 128): reshape only regroups whole (8,128) vreg tiles, so the
    # axis-0 sum lowers to plain VPU vector adds (no XLU / scalar work in the hot loop).
    tr = contrib.shape[0]
    acc_ref[...] += jnp.sum(contrib.reshape(tr // 8, 8, LANES), axis=0)

    @pl.when(s == pl.num_programs(1) - 1)
    def _():
        o_ref[...] = acc_ref[...]        # lane-dense (8,128) unmasked store, once per chunk


def weighted_mse_loss(preds, target, weight, *, tile_rows=1024, num_parallel=2):
    """preds, target: same shape (e.g. NCHW). weight: (num_classes,) float.

    Dtypes are preserved: pass preds in the model's native dtype (f32/bf16) and target as
    integer class indices (e.g. int8) to minimize HBM traffic.  Float targets are also
    accepted (exact match against integer class values, as in the torch module).
    """
    assert preds.shape == target.shape
    batch = preds.shape[0]                      # torch: target.size()[0]
    num_classes = int(weight.shape[0])
    total = int(preds.size)

    rows = -(-total // LANES)                   # ceil(total / 128)

    # Parallel axis: lets v7x megacore shard the row range across both TensorCores.
    P = num_parallel if rows >= num_parallel * ROW_ALIGN else 1

    # Tile rows: as large as allowed (amortize ~0.35us/step pipeline overhead), clamped to
    # per-chunk work, multiple of ROW_ALIGN.  (1024,128) f32 + int8 tiles double-buffered
    # ~= 1.3 MiB, far under the scoped VMEM limit on v5e/v6e/v7x.
    tile_rows = max(ROW_ALIGN, (tile_rows // ROW_ALIGN) * ROW_ALIGN)
    rows_per_chunk = -(-rows // P)
    tr = min(tile_rows, -(-rows_per_chunk // ROW_ALIGN) * ROW_ALIGN)
    steps = -(-rows_per_chunk // tr)
    rows_padded = P * steps * tr

    # Pad remainder with preds=0 and target=num_classes (matches no class -> weight 0),
    # so padded elements contribute exactly zero.  No-op when shapes already tile.
    pad = rows_padded * LANES - total
    p_flat = preds.reshape(-1)
    t_flat = target.reshape(-1)
    if pad:
        p_flat = jnp.pad(p_flat, (0, pad))
        t_flat = jnp.pad(t_flat, (0, pad), constant_values=num_classes)

    p2 = p_flat.reshape(rows_padded, LANES)
    t2 = t_flat.reshape(rows_padded, LANES)
    w = weight.astype(jnp.float32)

    kernel = functools.partial(_wmse_kernel, num_classes=num_classes)

    partials = pl.pallas_call(
        kernel,
        out_shape=jax.ShapeDtypeStruct((P * 8, LANES), jnp.float32),
        grid_spec=pltpu.PrefetchScalarGridSpec(
            num_scalar_prefetch=0,
            grid=(P, steps),
            in_specs=[
                # small class-weight vector lives in SMEM (scalar reads)
                pl.BlockSpec(memory_space=pltpu.MemorySpace.SMEM),
                pl.BlockSpec((tr, LANES), lambda p_i, s: (p_i * steps + s, 0)),
                pl.BlockSpec((tr, LANES), lambda p_i, s: (p_i * steps + s, 0)),
            ],
            # one lane-dense (8,128) partial-sum block per parallel chunk
            out_specs=pl.BlockSpec((8, LANES), lambda p_i, s: (p_i, 0)),
            scratch_shapes=[pltpu.VMEM((8, LANES), jnp.float32)],
        ),
        compiler_params=pltpu.CompilerParams(
            dimension_semantics=("parallel", "arbitrary"),
        ),
    )(w, p2, t2)

    # Tiny epilogue: reduce P*8*128 partials and apply the 1/batch normalization.
    return jnp.sum(partials) / jnp.float32(batch)


def weighted_mse_loss_ref(preds, target, weight):
    """Pure-JAX reference mirroring the PyTorch forward."""
    preds = preds.astype(jnp.float32)
    target = target.astype(jnp.float32)
    wl = jnp.zeros_like(target)
    for i in range(weight.shape[0]):
        wl = jnp.where(target == jnp.float32(i), weight[i], wl)
    return jnp.sum(wl * (preds - target) ** 2) / target.shape[0]


if __name__ == "__main__":
    key = jax.random.PRNGKey(0)
    k1, k2 = jax.random.split(key)

    # Deterministic synthetic inputs: NCHW predictions + integer-class targets.
    B, C, H, W = 2, 4, 16, 16
    num_classes = 3
    weight = jnp.array([1.0, 2.0, 0.5], dtype=jnp.float32)   # module __init__ weight

    preds = jax.random.normal(k1, (B, C, H, W), dtype=jnp.float32)
    target_i32 = jax.random.randint(k2, (B, C, H, W), 0, num_classes)
    target_f32 = target_i32.astype(jnp.float32)              # torch-style float target

    ref = weighted_mse_loss_ref(preds, target_f32, weight)

    # Path 1: float targets, exactly as the torch module receives them.
    loss = weighted_mse_loss(preds, target_f32, weight)
    loss = jax.block_until_ready(loss)
    assert jnp.allclose(loss, ref, rtol=1e-5, atol=1e-5), (loss, ref)

    # Path 2: narrow int8 class targets (recommended bandwidth-saving path).
    loss_i8 = weighted_mse_loss(preds, target_i32.astype(jnp.int8), weight)
    loss_i8 = jax.block_until_ready(loss_i8)
    assert jnp.allclose(loss_i8, ref, rtol=1e-5, atol=1e-5), (loss_i8, ref)

    print("KERNEL_OK")
</pallas_src>

<mosaic_0001>
module attributes {stable_mosaic.version = 11 : i64} {
  func.func @_wmse_kernel(%arg0: i32, %arg1: i32, %arg2: memref<3xf32, #tpu.memory_space<smem>>, %arg3: memref<32x128xf32, #tpu.memory_space<vmem>>, %arg4: memref<32x128xf32, #tpu.memory_space<vmem>>, %arg5: memref<8x128xf32, #tpu.memory_space<vmem>>, %arg6: memref<8x128xf32, #tpu.memory_space<vmem>>) attributes {dimension_semantics = [#tpu.dimension_semantics<parallel>, #tpu.dimension_semantics<arbitrary>], iteration_bounds = array<i64: 1, 1>, scalar_prefetch = 0 : i64, scratch_operands = 1 : i64, tpu.core_type = #tpu.core_type<tc>, window_params = [{transform_indices = @transform_0, window_bounds = array<i64: 3>}, {transform_indices = @transform_1, window_bounds = array<i64: 32, 128>}, {transform_indices = @transform_2, window_bounds = array<i64: 32, 128>}, {transform_indices = @transform_3, window_bounds = array<i64: 8, 128>}]} {
    %c0_i32 = arith.constant 0 : i32
    %0 = arith.cmpi eq, %arg1, %c0_i32 : i32
    %1 = arith.extui %0 : i1 to i32
    %c0_i32_0 = arith.constant 0 : i32
    %2 = arith.cmpi ne, %1, %c0_i32_0 : i32
    scf.if %2 {
      %cst_15 = arith.constant 0.000000e+00 : f32
      %32 = vector.broadcast %cst_15 : f32 to vector<8x128xf32>
      %c0_16 = arith.constant 0 : index
      %c0_17 = arith.constant 0 : index
      %33 = vector.load %arg6[%c0_16, %c0_17] : memref<8x128xf32, #tpu.memory_space<vmem>>, vector<8x128xf32>
      tpu.vector_store %arg6[%c0_16, %c0_17], %32 {strides = array<i32>} : memref<8x128xf32, #tpu.memory_space<vmem>>, vector<8x128xf32>,
    } else {
    }
    %c0 = arith.constant 0 : index
    %c0_1 = arith.constant 0 : index
    %3 = vector.load %arg3[%c0, %c0_1] : memref<32x128xf32, #tpu.memory_space<vmem>>, vector<32x128xf32>
    %c0_2 = arith.constant 0 : index
    %c0_3 = arith.constant 0 : index
    %4 = vector.load %arg4[%c0_2, %c0_3] : memref<32x128xf32, #tpu.memory_space<vmem>>, vector<32x128xf32>
    %cst = arith.constant 0.000000e+00 : f32
    %5 = vector.broadcast %cst : f32 to vector<32x128xf32>
    %cst_4 = arith.constant 0.000000e+00 : f32
    %6 = vector.broadcast %cst_4 : f32 to vector<32x128xf32>
    %7 = arith.cmpf oeq, %4, %6 : vector<32x128xf32>
    %c0_5 = arith.constant 0 : index
    %8 = memref.load %arg2[%c0_5] : memref<3xf32, #tpu.memory_space<smem>>
    %9 = vector.broadcast %8 : f32 to vector<32x128xf32>
    %10 = arith.select %7, %9, %5 : vector<32x128xi1>, vector<32x128xf32>
    %cst_6 = arith.constant 1.000000e+00 : f32
    %11 = vector.broadcast %cst_6 : f32 to vector<32x128xf32>
    %12 = arith.cmpf oeq, %4, %11 : vector<32x128xf32>
    %c1 = arith.constant 1 : index
    %13 = memref.load %arg2[%c1] : memref<3xf32, #tpu.memory_space<smem>>
    %14 = vector.broadcast %13 : f32 to vector<32x128xf32>
    %15 = arith.select %12, %14, %10 : vector<32x128xi1>, vector<32x128xf32>
    %cst_7 = arith.constant 2.000000e+00 : f32
    %16 = vector.broadcast %cst_7 : f32 to vector<32x128xf32>
    %17 = arith.cmpf oeq, %4, %16 : vector<32x128xf32>
    %c2 = arith.constant 2 : index
    %18 = memref.load %arg2[%c2] : memref<3xf32, #tpu.memory_space<smem>>
    %19 = vector.broadcast %18 : f32 to vector<32x128xf32>
    %20 = arith.select %17, %19, %15 : vector<32x128xi1>, vector<32x128xf32>
    %21 = arith.subf %3, %4 : vector<32x128xf32>
    %22 = arith.mulf %20, %21 : vector<32x128xf32>
    %23 = arith.mulf %22, %21 : vector<32x128xf32>
    %c0_8 = arith.constant 0 : index
    %c0_9 = arith.constant 0 : index
    %24 = vector.load %arg6[%c0_8, %c0_9] : memref<8x128xf32, #tpu.memory_space<vmem>>, vector<8x128xf32>
    %25 = vector.shape_cast %23 : vector<32x128xf32> to vector<4x8x128xf32>
    %cst_10 = arith.constant dense<0.000000e+00> : vector<8x128xf32>
    %26 = vector.multi_reduction <add>, %25, %cst_10 [0] : vector<4x8x128xf32> to vector<8x128xf32>
    %27 = arith.addf %24, %26 : vector<8x128xf32>
    %c0_11 = arith.constant 0 : index
    %c0_12 = arith.constant 0 : index
    %28 = vector.load %arg6[%c0_11, %c0_12] : memref<8x128xf32, #tpu.memory_space<vmem>>, vector<8x128xf32>
    tpu.vector_store %arg6[%c0_11, %c0_12], %27 {strides = array<i32>} : memref<8x128xf32, #tpu.memory_space<vmem>>, vector<8x128xf32>,
    %c0_i32_13 = arith.constant 0 : i32
    %29 = arith.cmpi eq, %arg1, %c0_i32_13 : i32
    %30 = arith.extui %29 : i1 to i32
    %c0_i32_14 = arith.constant 0 : i32
    %31 = arith.cmpi ne, %30, %c0_i32_14 : i32
    scf.if %31 {
      %c0_15 = arith.constant 0 : index
      %c0_16 = arith.constant 0 : index
      %32 = vector.load %arg6[%c0_15, %c0_16] : memref<8x128xf32, #tpu.memory_space<vmem>>, vector<8x128xf32>
      %c0_17 = arith.constant 0 : index
      %c0_18 = arith.constant 0 : index
      %33 = vector.load %arg5[%c0_17, %c0_18] : memref<8x128xf32, #tpu.memory_space<vmem>>, vector<8x128xf32>
      tpu.vector_store %arg5[%c0_17, %c0_18], %32 {strides = array<i32>} : memref<8x128xf32, #tpu.memory_space<vmem>>, vector<8x128xf32>,
    } else {
    }
    return
  }
  func.func @transform_0(%arg0: i32, %arg1: i32) -> i32 {
    %c0_i32 = arith.constant 0 : i32
    %c0_i32_0 = arith.constant 0 : i32
    return %c0_i32 : i32
  }
  func.func @transform_1(%arg0: i32, %arg1: i32) -> (i32, i32) {
    %c1_i32 = arith.constant 1 : i32
    %0 = arith.muli %arg0, %c1_i32 : i32
    %1 = arith.addi %0, %arg1 : i32
    %c0_i32 = arith.constant 0 : i32
    %c0_i32_0 = arith.constant 0 : i32
    return %1, %c0_i32 : i32, i32
  }
  func.func @transform_2(%arg0: i32, %arg1: i32) -> (i32, i32) {
    %c1_i32 = arith.constant 1 : i32
    %0 = arith.muli %arg0, %c1_i32 : i32
    %1 = arith.addi %0, %arg1 : i32
    %c0_i32 = arith.constant 0 : i32
    %c0_i32_0 = arith.constant 0 : i32
    return %1, %c0_i32 : i32, i32
  }
  func.func @transform_3(%arg0: i32, %arg1: i32) -> (i32, i32) {
    %c0_i32 = arith.constant 0 : i32
    %c0_i32_0 = arith.constant 0 : i32
    return %arg0, %c0_i32 : i32, i32
  }
}

</mosaic_0001>

<llo_original>
// kernel: tpu_custom_call.1
$region0: #{tpu_custom_call.1}
  #allocation0 [shape = 'u32[]', space=smem, size = 0x4, offset = 0x4, fixed_abs, tag = 'smem constant byte address 0x4 - core index']
  #allocation1 [shape = 'u32[144,128]{1,0:T(1,128)}', space=vmem, size = 0x12000, scoped, tag = 'internal scratch']
  #allocation2 [shape = 'f32[8,128]{1,0:T(8,128)}', space=vmem, size = 0x1000, scoped, tag = 'scratch operand']
  %s0 = inlined_call_operand.hbm [shape: f32[3], index: 0, kind: input, shape index: {}]
  %s1 = inlined_call_operand.hbm [shape: f32[32,128], index: 1, kind: input, shape index: {}]
  %s2 = inlined_call_operand.hbm [shape: f32[32,128], index: 2, kind: input, shape index: {}]
  %s3 = inlined_call_operand.hbm [shape: f32[8,128], index: 3, kind: output, shape index: {}]
  %s4 = sld [smem:[#allocation0]]
  $region42: #{tpu_custom_call.1} parent=0
    _
  %s6 = ssub.s32 1, %s4
  %s7 = scalar_select 0, %s6, %s4
  $region1: #{tpu_custom_call.1} parent=0
    #allocation3 [shape = 'u8[512]{0}', space=smem, size = 0x200, scoped, tag = 'input window, operand 0, single buffered']
    #allocation4 [shape = 's32[1]{0}', space=sflag, size = 0x4, scoped, tag = 'scoped memory for tpu_custom_call.1']
    #allocation5 [shape = 's32[1]{0}', space=sflag, size = 0x4, scoped, tag = 'scoped memory for tpu_custom_call.1']
    #allocation6 [shape = 's32[1]{0}', space=sflag, size = 0x4, scoped, tag = 'scoped memory for tpu_custom_call.1']
    #allocation7 [shape = 'u8[16384]{0}', space=vmem, size = 0x4000, scoped, tag = 'input window, operand 1, single buffered']
    #allocation8 [shape = 'u8[16384]{0}', space=vmem, size = 0x4000, scoped, tag = 'input window, operand 2, single buffered']
    #allocation9 [shape = 's32[1]{0}', space=sflag, size = 0x4, scoped, tag = 'scoped memory for tpu_custom_call.1']
    #allocation10 [shape = 'u8[4096]{0}', space=vmem, size = 0x1000, scoped, tag = 'output window, operand 0, single buffered']
    %8 = vsyncpa [#allocation6], 0
    %9 = vsyncpa [#allocation4], 0
    %10 = vsyncpa [#allocation9], 0
    %11 = vsyncpa [#allocation5], 0
    // Predicated region
    $region2: #{tpu_custom_call.1} parent=1 // pred_check
      _
    $region3: #{tpu_custom_call.1} parent=1 // pred_check_branch
      %13 = sbr.rel (0) target = $region5
    $region4: #{tpu_custom_call.1} parent=1 // pred_region
      %s15 = ssub.s32 16, 16
      %16 = vsyncadd [#allocation6], %s15
      %19 = dma.hbm_to_smem %s0, 16, [#allocation3], [#allocation6]
    $region5: #{tpu_custom_call.1} parent=1 // pred_fallthru
      _
    // Predicated region
    $region6: #{tpu_custom_call.1} parent=1 // pred_check
      _
    $region7: #{tpu_custom_call.1} parent=1 // pred_check_branch
      %21 = sbr.rel (0) target = $region9
    $region8: #{tpu_custom_call.1} parent=1 // pred_region
      %s22 = sadd.s32 0, 0
      %s23 = smul.u32 4, %s22
      %s25 = ssub.s32 512, 512
      %26 = vsyncadd [#allocation4], %s25
      %s27 = smul.addr %s23, 128
      %s28 = scalar_lea.hbm %s1, %s27
      %s29 = sshll.u32 [#allocation7], 4
      %s30 = int_to_ptr.vmem [resolvable:$true] %s29
      %35 = dma.hbm_to_vmem [thread:$0]  %s28, 512, %s30, [#allocation4], 128, 128, 8
    $region9: #{tpu_custom_call.1} parent=1 // pred_fallthru
      _
    // Predicated region
    $region10: #{tpu_custom_call.1} parent=1 // pred_check
      _
    $region11: #{tpu_custom_call.1} parent=1 // pred_check_branch
      %37 = sbr.rel (0) target = $region13
    $region12: #{tpu_custom_call.1} parent=1 // pred_region
      %s38 = sadd.s32 0, 0
      %s39 = smul.u32 4, %s38
      %s41 = ssub.s32 512, 512
      %42 = vsyncadd [#allocation9], %s41
      %s43 = smul.addr %s39, 128
      %s44 = scalar_lea.hbm %s2, %s43
      %s45 = sshll.u32 [#allocation8], 4
      %s46 = int_to_ptr.vmem [resolvable:$true] %s45
      %51 = dma.hbm_to_vmem [thread:$0]  %s44, 512, %s46, [#allocation9], 128, 128, 8
    $region13: #{tpu_custom_call.1} parent=1 // pred_fallthru
      _
    // Predicated region
    $region14: #{tpu_custom_call.1} parent=1 // pred_check
      _
    $region15: #{tpu_custom_call.1} parent=1 // pred_check_branch
      %53 = sbr.rel (0) target = $region17
    $region16: #{tpu_custom_call.1} parent=1 // pred_region
      %54 = dma.done [#allocation6], 16
    $region17: #{tpu_custom_call.1} parent=1 // pred_fallthru
      _
    // Predicated region
    $region18: #{tpu_custom_call.1} parent=1 // pred_check
      _
    $region19: #{tpu_custom_call.1} parent=1 // pred_check_branch
      %56 = sbr.rel (0) target = $region21
    $region20: #{tpu_custom_call.1} parent=1 // pred_region
      %57 = dma.done [#allocation4], 512
    $region21: #{tpu_custom_call.1} parent=1 // pred_fallthru
      _
    // Predicated region
    $region22: #{tpu_custom_call.1} parent=1 // pred_check
      _
    $region23: #{tpu_custom_call.1} parent=1 // pred_check_branch
      %59 = sbr.rel (0) target = $region25
    $region24: #{tpu_custom_call.1} parent=1 // pred_region
      %60 = dma.done [#allocation9], 512
    $region25: #{tpu_custom_call.1} parent=1 // pred_fallthru
      _
    %61 = sfence
    %s62 = sadd.s32 0, 0
    %s63 = smul.u32 4, %s62
    %s64 = sadd.s32 0, 0
    %s65 = smul.u32 4, %s64
    %p66 = scmp.eq.s32.totalorder 0, 0
    // Predicated region
    $region26: #{tpu_custom_call.1} parent=1 // pred_check
      %p67 = pneg %p66
    $region27: #{tpu_custom_call.1} parent=1 // pred_check_branch
      %69 = sbr.rel (%p67) target = $region29
    $region28: #{tpu_custom_call.1} parent=1 // pred_region
      %70 = vst [vmem:[#allocation2] sm:$0xff] 0.0
    $region29: #{tpu_custom_call.1} parent=1 // pred_fallthru
      _
    %v71 = vld [vmem:[#allocation7] sm:$0xff]
    %v72 = vld [vmem:[#allocation7 + $0x8] sm:$0xff]
    %v73 = vld [vmem:[#allocation7 + $0x10] sm:$0xff]
    %v74 = vld [vmem:[#allocation7 + $0x18] sm:$0xff]
    %v75 = vld [vmem:[#allocation8] sm:$0xff]
    %v76 = vld [vmem:[#allocation8 + $0x8] sm:$0xff]
    %v77 = vld [vmem:[#allocation8 + $0x10] sm:$0xff]
    %v78 = vld [vmem:[#allocation8 + $0x18] sm:$0xff]
    %vm79 = vcmp.eq.f32.partialorder %v75, 0.0
    %vm80 = vcmp.eq.f32.partialorder %v76, 0.0
    %vm81 = vcmp.eq.f32.partialorder %v77, 0.0
    %vm82 = vcmp.eq.f32.partialorder %v78, 0.0
    %s83 = sld [smem:[#allocation3]]
    %v84 = vstv %s83
    %v85 = vsel %vm79, %v84, 0.0
    %v86 = vsel %vm80, %v84, 0.0
    %v87 = vsel %vm81, %v84, 0.0
    %v88 = vsel %vm82, %v84, 0.0
    %vm89 = vcmp.eq.f32.partialorder %v75, 1.0
    %vm90 = vcmp.eq.f32.partialorder %v76, 1.0
    %vm91 = vcmp.eq.f32.partialorder %v77, 1.0
    %vm92 = vcmp.eq.f32.partialorder %v78, 1.0
    %s93 = sld [smem:[#allocation3 + $0x1]]
    %v94 = vstv %s93
    %v95 = vsel %vm89, %v94, %v85
    %v96 = vsel %vm90, %v94, %v86
    %v97 = vsel %vm91, %v94, %v87
    %v98 = vsel %vm92, %v94, %v88
    %vm99 = vcmp.eq.f32.partialorder %v75, 2.0
    %vm100 = vcmp.eq.f32.partialorder %v76, 2.0
    %vm101 = vcmp.eq.f32.partialorder %v77, 2.0
    %vm102 = vcmp.eq.f32.partialorder %v78, 2.0
    %s103 = sld [smem:[#allocation3 + $0x2]]
    %v104 = vstv %s103
    %v105 = vsel %vm99, %v104, %v95
    %v106 = vsel %vm100, %v104, %v96
    %v107 = vsel %vm101, %v104, %v97
    %v108 = vsel %vm102, %v104, %v98
    %v109 = vsub.f32 %v71, %v75
    %v110 = vsub.f32 %v72, %v76
    %v111 = vsub.f32 %v73, %v77
    %v112 = vsub.f32 %v74, %v78
    %v113 = vmul.f32 %v105, %v109
    %v114 = vmul.f32 %v106, %v110
    %v115 = vmul.f32 %v107, %v111
    %v116 = vmul.f32 %v108, %v112
    %v117 = vmul.f32 %v113, %v109
    %v118 = vmul.f32 %v114, %v110
    %v119 = vmul.f32 %v115, %v111
    %v120 = vmul.f32 %v116, %v112
    %v121 = vld [vmem:[#allocation2] sm:$0xff]
    %v122 = vadd.f32 %v117, %v118
    %v123 = vadd.f32 %v122, %v119
    %v124 = vadd.f32 %v123, %v120
    %v125 = vadd.f32 %v121, %v124
    %126 = vst [vmem:[#allocation2] sm:$0xff] %v125
    // Predicated region
    $region30: #{tpu_custom_call.1} parent=1 // pred_check
      %p127 = pneg %p66
    $region31: #{tpu_custom_call.1} parent=1 // pred_check_branch
      %129 = sbr.rel (%p127) target = $region33
    $region32: #{tpu_custom_call.1} parent=1 // pred_region
      %v130 = vld [vmem:[#allocation2] sm:$0xff]
      %131 = vst [vmem:[#allocation10] sm:$0xff] %v130
    $region33: #{tpu_custom_call.1} parent=1 // pred_fallthru
      _
    // Predicated region
    $region34: #{tpu_custom_call.1} parent=1 // pred_check
      _
    $region35: #{tpu_custom_call.1} parent=1 // pred_check_branch
      %133 = sbr.rel (0) target = $region37
    $region36: #{tpu_custom_call.1} parent=1 // pred_region
      %s135 = ssub.s32 128, 128
      %136 = vsyncadd [#allocation5], %s135
      %s138 = sshll.u32 [#allocation10], 4
      %s139 = int_to_ptr.vmem [resolvable:$true] %s138
      %141 = dma.vmem_to_hbm [thread:$0]  %s139, 128, %s3, [#allocation5]
    $region37: #{tpu_custom_call.1} parent=1 // pred_fallthru
      _
    // Predicated region
    $region38: #{tpu_custom_call.1} parent=1 // pred_check
      _
    $region39: #{tpu_custom_call.1} parent=1 // pred_check_branch
      %143 = sbr.rel (0) target = $region41
    $region40: #{tpu_custom_call.1} parent=1 // pred_region
      %144 = dma.done [#allocation5], 128
    $region41: #{tpu_custom_call.1} parent=1 // pred_fallthru
      _
    %145 = vsyncpa [#allocation4], 1
    %146 = vsyncpa [#allocation9], 1
    %147 = vsyncpa [#allocation5], 1
    %148 = vsyncpa [#allocation6], 1

</llo_original>
